<compile_context>
chip_gen: v6e
topology: v6e:2x2x1
jax: 0.10.0
libtpu: 0.0.40
codegen_flags: <defaults>
</compile_context>

<pallas_src>
import jax
import jax.numpy as jnp
from jax import lax
from jax.experimental import pallas as pl
from jax.experimental.pallas import tpu as pltpu

_LANES = 128
_SUBLANES = 8
_TM_MAX = 8192    # rows per streamed tile (8192 * 128 * 4B = 4 MiB for f32)
_CHUNK = 256      # rows folded per inner-loop iteration (32 f32 vregs)


def _round_up(n, m):
    return -(-n // m) * m


def _cdiv(a, b):
    return -(-a // b)


def _sublane_multiple(*dtypes):
    """Minimum legal sublane multiple for the given dtypes (8 / 16 / 32)."""
    m = 8
    for dt in dtypes:
        m = max(m, {4: 8, 2: 16, 1: 32}.get(jnp.dtype(dt).itemsize, 32))
    return m


def _num_tensorcores():
    """2 when one Pallas device spans two TensorCores (v4 / v5p / v7x), where a
    'parallel' leading grid axis can shard across cores; 1 otherwise
    (v2/v3/v5e/v6e).  NOTE: plain 'parallel' is at worst neutral, so an
    over-estimate here is still correct (each core index owns its own output
    block and sees the full resident mu/logvar block)."""
    try:
        kind = jax.devices()[0].device_kind.lower()
    except Exception:
        return 1
    if ("v4" in kind) or ("v5p" in kind) or ("v7" in kind) or ("7x" in kind):
        return 2
    return 1


def _as_slab(a, sub, pad_rows_to=1):
    """View `a` as a lane-dense (rows, 128) slab.

    When a.size is a multiple of 128 (and rows >= sub / pad_rows_to) this is a
    pure reshape — no copy.  Otherwise the flat array is zero-padded minimally;
    padded entries contribute exactly 0 to both loss terms:
      MSE: (0 - 0)^2 = 0,   KLD: 1 + 0 - 0 - exp(0) = 0.
    """
    n = a.size
    rows = max(_cdiv(n, _LANES), sub)
    rows = _round_up(rows, pad_rows_to)
    total = rows * _LANES
    flat = a.reshape(-1)
    if total != n:
        flat = jnp.pad(flat, (0, total - n))
    return flat.reshape(rows, _LANES)


def _make_kernel(*, tm, chunk, steps, valid_rows, mask_needed):
    """Build the VAE-loss kernel for a static tiling configuration."""
    n_chunks = tm // chunk

    def kernel(x_ref, x0_ref, mu_ref, lv_ref, rec_ref, kld_ref):
        c = pl.program_id(0)        # core / row-range axis ("parallel")
        i = pl.program_id(1)        # streaming reduction axis ("arbitrary")

        @pl.when(i == 0)
        def _init():
            # rec output block is resident across i (constant index map): it
            # doubles as the accumulator — no VMEM scratch needed.
            rec_ref[...] = jnp.zeros_like(rec_ref)

        # Nominal global row of this tile's first row.  The input index map
        # clamps the DMA in-bounds; the mask below zeroes any row that does
        # not exist in the array (partial boundary tiles / clamped re-reads).
        base = (c * steps + i) * tm

        def fold(k, acc):
            r0 = pl.multiple_of(k * chunk, chunk)
            xs = x_ref[pl.ds(r0, chunk), :].astype(jnp.float32)
            ys = x0_ref[pl.ds(r0, chunk), :].astype(jnp.float32)
            d = ys - xs
            sq = d * d
            if mask_needed:
                rid = base + r0 + lax.broadcasted_iota(jnp.int32, (chunk, 1), 0)
                sq = jnp.where(rid < valid_rows, sq, 0.0)   # select: NaN-safe
            # VALU-only fold of (chunk,128) onto an (8,128) partial sum.
            return acc + jnp.sum(sq.reshape(-1, _SUBLANES, _LANES), axis=0)

        part = lax.fori_loop(
            0, n_chunks, fold,
            jnp.zeros((_SUBLANES, _LANES), jnp.float32),
            unroll=(n_chunks <= 16))
        rec_ref[0] += part

        @pl.when(i == steps - 1)
        def _finalize():
            # Every core sees the *full* resident mu/logvar block (constant
            # index map), so each core writes the complete KLD partial sum;
            # the wrapper reads core 0 only.  Padded entries contribute 0.
            mu = mu_ref[...].astype(jnp.float32)
            lv = lv_ref[...].astype(jnp.float32)
            term = 1.0 + lv - mu * mu - jnp.exp(lv)
            kld_ref[0] = jnp.sum(term.reshape(-1, _SUBLANES, _LANES), axis=0)

    return kernel


@jax.jit
def vae_loss(x, x0, mu, logvar):
    """Returns (rec, kld) f32 scalars, matching VAELoss.forward semantics."""
    n_elem = x.size
    z_elem = mu.size

    sub_x = _sublane_multiple(x.dtype, x0.dtype)
    sub_z = _sublane_multiple(mu.dtype, logvar.dtype)

    # ---- lane-dense views (zero-copy reshape in the common case) -----------
    x2 = _as_slab(x, sub_x)
    x02 = _as_slab(x0, sub_x)
    rows = x2.shape[0]

    # mu / logvar are tiny: one resident, sublane-rounded slab each.
    mu2 = _as_slab(mu, sub_z, pad_rows_to=sub_z)
    lv2 = _as_slab(logvar, sub_z, pad_rows_to=sub_z)
    zr = mu2.shape[0]

    # ---- tiling -------------------------------------------------------------
    nc = _num_tensorcores()
    quantum = _CHUNK if rows >= _CHUNK else sub_x     # tile-size granularity
    if rows < nc * 2 * quantum:                        # too small to split
        nc = 1
    tm_cap = min(_TM_MAX, (rows // quantum) * quantum)   # legal and <= rows
    rpc = _cdiv(rows, nc)                                 # nominal rows / core
    steps = _cdiv(rpc, tm_cap)
    tm = min(_round_up(_cdiv(rpc, steps), quantum), tm_cap)
    steps = _cdiv(rpc, tm)
    chunk = _CHUNK if quantum == _CHUNK else tm        # divides tm exactly

    mask_needed = (nc * steps * tm != rows)
    last_block = _cdiv(rows, tm) - 1

    if mask_needed:
        # Clamp keeps every DMA in-bounds; nominally-OOB tiles are fully
        # masked in-kernel so a clamped re-read contributes zero.
        row_map = lambda c, i: (jnp.minimum(c * steps + i, last_block), 0)
    else:
        row_map = lambda c, i: (c * steps + i, 0)

    cost = pl.CostEstimate(
        flops=3 * n_elem + 6 * z_elem,
        transcendentals=z_elem,
        bytes_accessed=(x.size * x.dtype.itemsize
                        + x0.size * x0.dtype.itemsize
                        + mu.size * mu.dtype.itemsize
                        + logvar.size * logvar.dtype.itemsize
                        + 2 * nc * _SUBLANES * _LANES * 4),
    )

    rec_part, kld_part = pl.pallas_call(
        _make_kernel(tm=tm, chunk=chunk, steps=steps,
                     valid_rows=rows, mask_needed=mask_needed),
        out_shape=(
            jax.ShapeDtypeStruct((nc, _SUBLANES, _LANES), jnp.float32),
            jax.ShapeDtypeStruct((nc, _SUBLANES, _LANES), jnp.float32),
        ),
        grid_spec=pltpu.PrefetchScalarGridSpec(
            num_scalar_prefetch=0,
            grid=(nc, steps),
            in_specs=[
                pl.BlockSpec((tm, _LANES), row_map),
                pl.BlockSpec((tm, _LANES), row_map),
                pl.BlockSpec((zr, _LANES), lambda c, i: (0, 0)),
                pl.BlockSpec((zr, _LANES), lambda c, i: (0, 0)),
            ],
            out_specs=[
                pl.BlockSpec((1, _SUBLANES, _LANES), lambda c, i: (c, 0, 0)),
                pl.BlockSpec((1, _SUBLANES, _LANES), lambda c, i: (c, 0, 0)),
            ],
        ),
        compiler_params=pltpu.CompilerParams(
            dimension_semantics=("parallel", "arbitrary"),
            vmem_limit_bytes=32 * 1024 * 1024,
        ),
        cost_estimate=cost,
    )(x2, x02, mu2, lv2)

    rec = jnp.sum(rec_part) / jnp.float32(n_elem)
    # Each core writes the full KLD sum over the resident mu/logvar block;
    # use core 0 (do NOT sum across cores).
    kld = -0.5 * jnp.sum(kld_part[0]) / jnp.float32(z_elem)
    return rec, kld


if __name__ == "__main__":
    key = jax.random.PRNGKey(0)
    k1, k2, k3, k4 = jax.random.split(key, 4)

    # Shapes implied by a small VAE: images [N, C, H, W], latents [N, Z].
    N, C, H, W = 2, 4, 16, 16
    Z = 32

    x = jax.random.normal(k1, (N, C, H, W), dtype=jnp.float32)        # reconstruction
    x0 = jax.random.normal(k2, (N, C, H, W), dtype=jnp.float32)       # original
    mu = jax.random.normal(k3, (N, Z), dtype=jnp.float32) * 0.5       # latent mean
    logvar = jax.random.normal(k4, (N, Z), dtype=jnp.float32) * 0.1   # latent log-var

    rec, kld = jax.block_until_ready(vae_loss(x, x0, mu, logvar))

    rec_ref = jnp.mean((x0 - x) ** 2)
    kld_ref = -0.5 * jnp.mean(1.0 + logvar - mu ** 2 - jnp.exp(logvar))
    assert jnp.allclose(rec, rec_ref, rtol=1e-5, atol=1e-6), (rec, rec_ref)
    assert jnp.allclose(kld, kld_ref, rtol=1e-5, atol=1e-6), (kld, kld_ref)

    # Second check: row count not divisible by the tile -> exercises the
    # partial-boundary tile + in-kernel row mask path (still zero-copy input).
    xb = jax.random.normal(k1, (2, 3, 16, 16), dtype=jnp.float32)
    x0b = jax.random.normal(k2, (2, 3, 16, 16), dtype=jnp.float32)
    mub = jax.random.normal(k3, (2, 20), dtype=jnp.float32) * 0.5
    lvb = jax.random.normal(k4, (2, 20), dtype=jnp.float32) * 0.1
    rec_b, kld_b = jax.block_until_ready(vae_loss(xb, x0b, mub, lvb))
    assert jnp.allclose(rec_b, jnp.mean((x0b - xb) ** 2), rtol=1e-5, atol=1e-6)
    assert jnp.allclose(
        kld_b, -0.5 * jnp.mean(1.0 + lvb - mub ** 2 - jnp.exp(lvb)),
        rtol=1e-5, atol=1e-6)

    print("KERNEL_OK")
</pallas_src>

<mosaic_0001>
module attributes {stable_mosaic.version = 11 : i64} {
  func.func @kernel(%arg0: i32, %arg1: i32, %arg2: memref<16x128xf32, #tpu.memory_space<vmem>>, %arg3: memref<16x128xf32, #tpu.memory_space<vmem>>, %arg4: memref<8x128xf32, #tpu.memory_space<vmem>>, %arg5: memref<8x128xf32, #tpu.memory_space<vmem>>, %arg6: memref<1x8x128xf32, #tpu.memory_space<vmem>>, %arg7: memref<1x8x128xf32, #tpu.memory_space<vmem>>) attributes {dimension_semantics = [#tpu.dimension_semantics<parallel>, #tpu.dimension_semantics<arbitrary>], iteration_bounds = array<i64: 1, 1>, scalar_prefetch = 0 : i64, scratch_operands = 0 : i64, tpu.core_type = #tpu.core_type<tc>, window_params = [{transform_indices = @transform_0, window_bounds = array<i64: 16, 128>}, {transform_indices = @transform_1, window_bounds = array<i64: 16, 128>}, {pipeline_mode = #tpu.pipeline_mode<synchronous>, transform_indices = @transform_2, window_bounds = array<i64: 8, 128>}, {pipeline_mode = #tpu.pipeline_mode<synchronous>, transform_indices = @transform_3, window_bounds = array<i64: 8, 128>}, {transform_indices = @transform_4, window_bounds = array<i64: 1, 8, 128>}, {transform_indices = @transform_5, window_bounds = array<i64: 1, 8, 128>}]} {
    %c0_i32 = arith.constant 0 : i32
    %0 = arith.cmpi eq, %arg1, %c0_i32 : i32
    %1 = arith.extui %0 : i1 to i32
    %c0_i32_0 = arith.constant 0 : i32
    %2 = arith.cmpi ne, %1, %c0_i32_0 : i32
    scf.if %2 {
      %cst_12 = arith.constant 0.000000e+00 : f32
      %24 = vector.broadcast %cst_12 : f32 to vector<1x8x128xf32>
      %c0_13 = arith.constant 0 : index
      %c0_14 = arith.constant 0 : index
      %c0_15 = arith.constant 0 : index
      %25 = vector.load %arg6[%c0_13, %c0_14, %c0_15] : memref<1x8x128xf32, #tpu.memory_space<vmem>>, vector<1x8x128xf32>
      tpu.vector_store %arg6[%c0_13, %c0_14, %c0_15], %24 {strides = array<i32>} : memref<1x8x128xf32, #tpu.memory_space<vmem>>, vector<1x8x128xf32>,
    } else {
    }
    %cst = arith.constant 0.000000e+00 : f32
    %3 = vector.broadcast %cst : f32 to vector<8x128xf32>
    %c0_i32_1 = arith.constant 0 : i32
    %c16_i32 = arith.constant 16 : i32
    %4 = arith.muli %c0_i32_1, %c16_i32 : i32
    %5 = tpu.assume_multiple %4, 16 : i32
    %6 = arith.index_cast %5 : i32 to index
    %c0 = arith.constant 0 : index
    %7 = vector.load %arg2[%6, %c0] : memref<16x128xf32, #tpu.memory_space<vmem>>, vector<16x128xf32>
    %8 = arith.index_cast %5 : i32 to index
    %c0_2 = arith.constant 0 : index
    %9 = vector.load %arg3[%8, %c0_2] : memref<16x128xf32, #tpu.memory_space<vmem>>, vector<16x128xf32>
    %10 = arith.subf %9, %7 : vector<16x128xf32>
    %11 = arith.mulf %10, %10 : vector<16x128xf32>
    %12 = vector.shape_cast %11 : vector<16x128xf32> to vector<2x8x128xf32>
    %cst_3 = arith.constant dense<0.000000e+00> : vector<8x128xf32>
    %13 = vector.multi_reduction <add>, %12, %cst_3 [0] : vector<2x8x128xf32> to vector<8x128xf32>
    %14 = arith.addf %3, %13 : vector<8x128xf32>
    %c1_i32 = arith.constant 1 : i32
    %c0_4 = arith.constant 0 : index
    %c0_5 = arith.constant 0 : index
    %c0_6 = arith.constant 0 : index
    %15 = vector.load %arg6[%c0_4, %c0_5, %c0_6] : memref<1x8x128xf32, #tpu.memory_space<vmem>>, vector<1x8x128xf32>
    %16 = vector.shape_cast %15 : vector<1x8x128xf32> to vector<8x128xf32>
    %17 = arith.addf %16, %14 : vector<8x128xf32>
    %c0_7 = arith.constant 0 : index
    %c0_8 = arith.constant 0 : index
    %c0_9 = arith.constant 0 : index
    %18 = vector.load %arg6[%c0_7, %c0_8, %c0_9] : memref<1x8x128xf32, #tpu.memory_space<vmem>>, vector<1x8x128xf32>
    %19 = vector.shape_cast %18 : vector<1x8x128xf32> to vector<8x128xf32>
    %20 = vector.shape_cast %17 : vector<8x128xf32> to vector<1x8x128xf32>
    tpu.vector_store %arg6[%c0_7, %c0_8, %c0_9], %20 {strides = array<i32>} : memref<1x8x128xf32, #tpu.memory_space<vmem>>, vector<1x8x128xf32>,
    %c0_i32_10 = arith.constant 0 : i32
    %21 = arith.cmpi eq, %arg1, %c0_i32_10 : i32
    %22 = arith.extui %21 : i1 to i32
    %c0_i32_11 = arith.constant 0 : i32
    %23 = arith.cmpi ne, %22, %c0_i32_11 : i32
    scf.if %23 {
      %c0_12 = arith.constant 0 : index
      %c0_13 = arith.constant 0 : index
      %24 = vector.load %arg4[%c0_12, %c0_13] : memref<8x128xf32, #tpu.memory_space<vmem>>, vector<8x128xf32>
      %c0_14 = arith.constant 0 : index
      %c0_15 = arith.constant 0 : index
      %25 = vector.load %arg5[%c0_14, %c0_15] : memref<8x128xf32, #tpu.memory_space<vmem>>, vector<8x128xf32>
      %cst_16 = arith.constant 1.000000e+00 : f32
      %26 = vector.broadcast %cst_16 : f32 to vector<8x128xf32>
      %27 = arith.addf %26, %25 : vector<8x128xf32>
      %28 = arith.mulf %24, %24 : vector<8x128xf32>
      %29 = arith.subf %27, %28 : vector<8x128xf32>
      %30 = math.exp %25 : vector<8x128xf32>
      %31 = arith.subf %29, %30 : vector<8x128xf32>
      %32 = vector.shape_cast %31 : vector<8x128xf32> to vector<1x8x128xf32>
      %cst_17 = arith.constant dense<0.000000e+00> : vector<8x128xf32>
      %33 = vector.multi_reduction <add>, %32, %cst_17 [0] : vector<1x8x128xf32> to vector<8x128xf32>
      %c0_18 = arith.constant 0 : index
      %c0_19 = arith.constant 0 : index
      %c0_20 = arith.constant 0 : index
      %34 = vector.load %arg7[%c0_18, %c0_19, %c0_20] : memref<1x8x128xf32, #tpu.memory_space<vmem>>, vector<1x8x128xf32>
      %35 = vector.shape_cast %34 : vector<1x8x128xf32> to vector<8x128xf32>
      %36 = vector.shape_cast %33 : vector<8x128xf32> to vector<1x8x128xf32>
      tpu.vector_store %arg7[%c0_18, %c0_19, %c0_20], %36 {strides = array<i32>} : memref<1x8x128xf32, #tpu.memory_space<vmem>>, vector<1x8x128xf32>,
    } else {
    }
    return
  }
  func.func @transform_0(%arg0: i32, %arg1: i32) -> (i32, i32) {
    %c1_i32 = arith.constant 1 : i32
    %0 = arith.muli %arg0, %c1_i32 : i32
    %1 = arith.addi %0, %arg1 : i32
    %c0_i32 = arith.constant 0 : i32
    %c0_i32_0 = arith.constant 0 : i32
    return %1, %c0_i32 : i32, i32
  }
  func.func @transform_1(%arg0: i32, %arg1: i32) -> (i32, i32) {
    %c1_i32 = arith.constant 1 : i32
    %0 = arith.muli %arg0, %c1_i32 : i32
    %1 = arith.addi %0, %arg1 : i32
    %c0_i32 = arith.constant 0 : i32
    %c0_i32_0 = arith.constant 0 : i32
    return %1, %c0_i32 : i32, i32
  }
  func.func @transform_2(%arg0: i32, %arg1: i32) -> (i32, i32) {
    %c0_i32 = arith.constant 0 : i32
    %c0_i32_0 = arith.constant 0 : i32
    %c0_i32_1 = arith.constant 0 : i32
    return %c0_i32, %c0_i32_0 : i32, i32
  }
  func.func @transform_3(%arg0: i32, %arg1: i32) -> (i32, i32) {
    %c0_i32 = arith.constant 0 : i32
    %c0_i32_0 = arith.constant 0 : i32
    %c0_i32_1 = arith.constant 0 : i32
    return %c0_i32, %c0_i32_0 : i32, i32
  }
  func.func @transform_4(%arg0: i32, %arg1: i32) -> (i32, i32, i32) {
    %c0_i32 = arith.constant 0 : i32
    %c0_i32_0 = arith.constant 0 : i32
    %c0_i32_1 = arith.constant 0 : i32
    return %arg0, %c0_i32, %c0_i32_0 : i32, i32, i32
  }
  func.func @transform_5(%arg0: i32, %arg1: i32) -> (i32, i32, i32) {
    %c0_i32 = arith.constant 0 : i32
    %c0_i32_0 = arith.constant 0 : i32
    %c0_i32_1 = arith.constant 0 : i32
    return %arg0, %c0_i32, %c0_i32_0 : i32, i32, i32
  }
}

</mosaic_0001>

<llo_original>
// kernel: vae_loss.1
$region0: #{vae_loss.1}
  #allocation0 [shape = 'u32[]', space=smem, size = 0x4, offset = 0x4, fixed_abs, tag = 'smem constant byte address 0x4 - core index']
  #allocation1 [shape = 'u32[144,128]{1,0:T(1,128)}', space=vmem, size = 0x12000, scoped, tag = 'internal scratch']
  %s0 = inlined_call_operand.vmem [shape: f32[16,128], index: 0, kind: input, shape index: {}]
  %s1 = inlined_call_operand.vmem [shape: f32[16,128], index: 1, kind: input, shape index: {}]
  %s2 = inlined_call_operand.vmem [shape: f32[8,128], index: 2, kind: input, shape index: {}]
  %s3 = inlined_call_operand.vmem [shape: f32[8,128], index: 3, kind: input, shape index: {}]
  %s4 = inlined_call_operand.vmem [shape: f32[1,8,128], index: 4, kind: output, shape index: {0}]
  %s5 = inlined_call_operand.vmem [shape: f32[1,8,128], index: 5, kind: output, shape index: {1}]
  %6 = xla_tuple %s4, %s5
  %s7 = sld [smem:[#allocation0]]
  $region42: #{vae_loss.1} parent=0
    _
  %s9 = ssub.s32 1, %s7
  %s10 = scalar_select 0, %s9, %s7
  // Predicated region
  $region2: #{vae_loss.1} parent=0 // pred_check
    _
  $region3: #{vae_loss.1} parent=0 // pred_check_branch
    %12 = sbr.rel (0) target = $region5
  $region4: #{vae_loss.1} parent=0 // pred_region
    %s13 = sadd.s32 0, 0
    %s14 = smul.u32 2, %s13
    %p15 = scmp.lt.s32.totalorder %s14, 1
    %s16 = scalar_select %p15, %s14, 1
    %s17 = smul.addr %s16, 8
    %s18 = scalar_lea.vmem %s0, %s17
    %s19 = sadd.s32 0, 0
    %s20 = smul.u32 2, %s19
  $region5: #{vae_loss.1} parent=0 // pred_fallthru
    _
  // Predicated region
  $region6: #{vae_loss.1} parent=0 // pred_check
    _
  $region7: #{vae_loss.1} parent=0 // pred_check_branch
    %22 = sbr.rel (0) target = $region9
  $region8: #{vae_loss.1} parent=0 // pred_region
    %s23 = sadd.s32 0, 0
    %s24 = smul.u32 2, %s23
    %p25 = scmp.lt.s32.totalorder %s24, 1
    %s26 = scalar_select %p25, %s24, 1
    %s27 = smul.addr %s26, 8
    %s28 = scalar_lea.vmem %s1, %s27
    %s29 = sadd.s32 0, 0
    %s30 = smul.u32 2, %s29
  $region9: #{vae_loss.1} parent=0 // pred_fallthru
    _
  // Predicated region
  $region10: #{vae_loss.1} parent=0 // pred_check
    _
  $region11: #{vae_loss.1} parent=0 // pred_check_branch
    %32 = sbr.rel (0) target = $region13
  $region12: #{vae_loss.1} parent=0 // pred_region
    _
  $region13: #{vae_loss.1} parent=0 // pred_fallthru
    _
  // Predicated region
  $region14: #{vae_loss.1} parent=0 // pred_check
    _
  $region15: #{vae_loss.1} parent=0 // pred_check_branch
    %34 = sbr.rel (0) target = $region17
  $region16: #{vae_loss.1} parent=0 // pred_region
    _
  $region17: #{vae_loss.1} parent=0 // pred_fallthru
    _
  %s35 = sadd.s32 0, 0
  %s36 = smul.u32 2, %s35
  %p37 = scmp.lt.s32.totalorder %s36, 1
  %s38 = scalar_select %p37, %s36, 1
  %s39 = smul.addr %s38, 8
  %s40 = scalar_lea.vmem %s0, %s39
  %s41 = sadd.s32 0, 0
  %s42 = smul.u32 2, %s41
  %p43 = scmp.lt.s32.totalorder %s42, 1
  %s44 = scalar_select %p43, %s42, 1
  %s45 = smul.addr %s44, 8
  %s46 = scalar_lea.vmem %s1, %s45
  %s47 = sadd.s32 0, 0
  %s48 = smul.u32 2, %s47
  %p49 = scmp.lt.s32.totalorder %s48, 1
  %s50 = scalar_select %p49, %s48, 1
  %s51 = smul.addr %s50, 8
  %s52 = scalar_lea.vmem %s0, %s51
  %s53 = sadd.s32 0, 0
  %s54 = smul.u32 2, %s53
  %s55 = sadd.s32 0, 0
  %s56 = smul.u32 2, %s55
  %p57 = scmp.lt.s32.totalorder %s56, 1
  %s58 = scalar_select %p57, %s56, 1
  %s59 = smul.addr %s58, 8
  %s60 = scalar_lea.vmem %s1, %s59
  %s61 = sadd.s32 0, 0
  %s62 = smul.u32 2, %s61
  %p63 = scmp.eq.s32.totalorder 0, 0
  // Predicated region
  $region18: #{vae_loss.1} parent=0 // pred_check
    %p64 = pneg %p63
  $region19: #{vae_loss.1} parent=0 // pred_check_branch
    %66 = sbr.rel (%p64) target = $region21
  $region20: #{vae_loss.1} parent=0 // pred_region
    %67 = vst [vmem:[%s4] sm:$0xff] 0.0
  $region21: #{vae_loss.1} parent=0 // pred_fallthru
    _
  %v68 = vld [vmem:[%s52] sm:$0xff]
  %v69 = vld [vmem:[%s52 + $0x8] sm:$0xff]
  %v70 = vld [vmem:[%s60] sm:$0xff]
  %v71 = vld [vmem:[%s60 + $0x8] sm:$0xff]
  %v72 = vsub.f32 %v70, %v68
  %v73 = vsub.f32 %v71, %v69
  %v74 = vmul.f32 %v72, %v72
  %v75 = vmul.f32 %v73, %v73
  %v76 = vadd.f32 %v74, %v75
  %v77 = vadd.f32 %v76, 0.0
  %v78 = vld [vmem:[%s4] sm:$0xff]
  %v79 = vadd.f32 %v78, %v77
  %80 = vst [vmem:[%s4] sm:$0xff] %v79
  // Predicated region
  $region22: #{vae_loss.1} parent=0 // pred_check
    %p81 = pneg %p63
  $region23: #{vae_loss.1} parent=0 // pred_check_branch
    %83 = sbr.rel (%p81) target = $region25
  $region24: #{vae_loss.1} parent=0 // pred_region
    %v84 = vld [vmem:[%s2] sm:$0xff]
    %v85 = vld [vmem:[%s3] sm:$0xff]
    %v86 = vadd.f32 %v85, 1.0
    %v87 = vmul.f32 %v84, %v84
    %v88 = vsub.f32 %v86, %v87
    %v89 = vmul.f32 %v85, 1.442695
    %v90 = vpow.pop %v89
    %v91 = vsub.f32 %v88, %v90
    %v92 = vadd.f32 %v91, 0.0
    %93 = vst [vmem:[%s5] sm:$0xff] %v92
  $region25: #{vae_loss.1} parent=0 // pred_fallthru
    _
  // Predicated region
  $region26: #{vae_loss.1} parent=0 // pred_check
    _
  $region27: #{vae_loss.1} parent=0 // pred_check_branch
    %95 = sbr.rel (0) target = $region29
  $region28: #{vae_loss.1} parent=0 // pred_region
    _
  $region29: #{vae_loss.1} parent=0 // pred_fallthru
    _
  // Predicated region
  $region30: #{vae_loss.1} parent=0 // pred_check
    _
  $region31: #{vae_loss.1} parent=0 // pred_check_branch
    %97 = sbr.rel (0) target = $region33
  $region32: #{vae_loss.1} parent=0 // pred_region
    _
  $region33: #{vae_loss.1} parent=0 // pred_fallthru
    _
  // Predicated region
  $region34: #{vae_loss.1} parent=0 // pred_check
    _
  $region35: #{vae_loss.1} parent=0 // pred_check_branch
    %99 = sbr.rel (0) target = $region37
  $region36: #{vae_loss.1} parent=0 // pred_region
    _
  $region37: #{vae_loss.1} parent=0 // pred_fallthru
    _
  // Predicated region
  $region38: #{vae_loss.1} parent=0 // pred_check
    _
  $region39: #{vae_loss.1} parent=0 // pred_check_branch
    %101 = sbr.rel (0) target = $region41
  $region40: #{vae_loss.1} parent=0 // pred_region
    _
  $region41: #{vae_loss.1} parent=0 // pred_fallthru
    _

</llo_original>
